<compile_context>
chip_gen: v7x
topology: tpu7x:2x2x1
jax: 0.10.0
libtpu: 0.0.40
codegen_flags: <defaults>
</compile_context>

<pallas_src>
import jax
import jax.numpy as jnp
from jax.experimental import pallas as pl
from jax.experimental.pallas import tpu as pltpu


# ----------------------------- hardware queries -----------------------------

def _tpu_info():
    try:
        return pltpu.get_tpu_info()
    except Exception:
        return None


def _vmem_capacity_bytes() -> int:
    info = _tpu_info()
    if info is not None:
        try:
            v = int(getattr(info, "vmem_capacity_bytes"))
            if v > 0:
                return v
        except (AttributeError, TypeError, ValueError):
            pass
    return 64 * 1024 * 1024          # conservative fallback (v7x physical VMEM)


def _num_tensorcores() -> int:
    info = _tpu_info()
    if info is not None:
        for name in ("num_cores", "num_tensorcores", "tensorcore_count",
                     "cores_per_chip"):
            try:
                v = int(getattr(info, name))
                if v > 0:
                    return v
            except (AttributeError, TypeError, ValueError):
                continue
    try:
        kind = jax.devices()[0].device_kind.lower()
    except Exception:
        return 1
    # dual-TensorCore ("megacore") chips; v5e / v6e have a single TC per chip.
    if ("v4" in kind) or ("v5p" in kind) or ("v5 p" in kind) or ("7" in kind):
        return 2
    return 1


# --------------------------------- kernel -----------------------------------

def _make_kernel(margin: float, B: int, D: int, TB: int, nt: int,
                 needs_mask: bool):
    margin = float(margin)

    def kernel(e0_ref, e1_ref, ld_ref, out_ref, acc_ref):
        i = pl.program_id(1)

        @pl.when(i == 0)
        def _init():
            acc_ref[...] = jnp.zeros_like(acc_ref)

        # Stream tiles in their native dtype; all math in f32 on-chip.
        e0 = e0_ref[...].astype(jnp.float32)
        e1 = e1_ref[...].astype(jnp.float32)
        diff = e0 - e1
        d2 = diff * diff

        # Row-sum on the MXU (idle slot) instead of an XLU rotate+add tree.
        ones_col = jnp.ones((D, 1), jnp.float32)
        dist = jnp.dot(d2, ones_col,
                       preferred_element_type=jnp.float32,
                       precision=jax.lax.Precision.HIGHEST)        # (TB, 1)

        ld = ld_ref[...]                                           # (TB, 1) in {0,1}
        s = jnp.sqrt(dist)
        hinge = jnp.maximum(0.0, margin - s)
        # (1-ld)*dist + ld*hinge^2, folded to save one mul+sub per row.
        loss = dist + ld * (hinge * hinge - dist)                  # (TB, 1)

        if needs_mask:
            # This grid step covers logical rows [t*TB, t*TB + TB); rows at or
            # beyond the true batch size hold garbage (ragged / clamped DMA
            # reads) -- zero them with a NaN-safe select before accumulating.
            t = pl.program_id(0) * nt + i
            row = jax.lax.broadcasted_iota(jnp.int32, (TB, 1), 0)
            loss = jnp.where(row < (B - t * TB), loss, 0.0)

        acc_ref[...] += jnp.sum(loss, keepdims=True)               # (1, 1)

        @pl.when(i == nt - 1)
        def _finalize():
            out_ref[...] = acc_ref[...].reshape(1, 1, 1)

    return kernel


# --------------------------------- wrapper ----------------------------------

def max_margin_contrastive_loss(embed_0, embed_1, label_0, label_1,
                                margin: float = 1.0,
                                metric: str = "euclidean",
                                num_cores: int | None = None,
                                tile_rows: int | None = None):
    """JAX/Pallas equivalent of MaxMarginContrastiveLoss.forward (euclidean)."""
    assert metric == "euclidean", "only 'euclidean' metric is implemented"
    B, D = embed_0.shape

    if num_cores is None:
        num_cores = _num_tensorcores()
    num_cores = max(1, int(num_cores))

    # Labels compared in their ORIGINAL dtype; shipped as one f32 indicator.
    label_diff = (label_0.reshape(B) != label_1.reshape(B))
    label_diff = label_diff.astype(jnp.float32).reshape(B, 1)

    # ---- tile sizing (chip-aware VMEM budget) ------------------------------
    itemsize = jnp.dtype(embed_0.dtype).itemsize
    sub = max(8, 32 // itemsize)            # native sublane multiple per dtype

    vmem_cap = _vmem_capacity_bytes()
    budget = max(8 * 1024 * 1024, min(int(vmem_cap * 0.70), 80 * 1024 * 1024))
    # Conservative per-row VMEM estimate:
    #   streamed embeddings : 2 inputs x 2 pipeline buffers x D x itemsize
    #   f32 tile temporaries: ~4 live (TB, D) f32 values
    #   (TB, 1)-shaped label buffers + tail temps (lane-padded to 128 lanes)
    per_row = 4 * D * itemsize + 4 * D * 4 + 4096
    tb_budget = max(sub, (budget // per_row) // sub * sub)
    if tile_rows is not None:
        tb_budget = min(tb_budget, max(sub, (int(tile_rows) // sub) * sub))

    rows_per_core = -(-B // num_cores)                  # ceil
    tb_cap = ((rows_per_core + sub - 1) // sub) * sub
    TB = max(sub, min(tb_budget, tb_cap))
    if num_cores == 1 and TB >= B:
        TB = B                               # one full-extent block (always legal)

    T_total = -(-B // TB)                    # number of real row-tiles
    nt = -(-T_total // num_cores)            # tiles per core
    last_blk = T_total - 1
    covered = num_cores * nt * TB
    needs_mask = covered != B

    # Scoped-VMEM limit: what we sized for plus headroom, below physical VMEM.
    vmem_limit = int(min(vmem_cap * 15 // 16, budget + 32 * 1024 * 1024))

    def blk_idx(c, i):
        # Clamp so no DMA starts fully out of bounds; duplicated/ragged rows
        # are zeroed in-kernel via the logical-row mask.
        return (jnp.minimum(c * nt + i, last_blk), 0)

    emb_spec = pl.BlockSpec((TB, D), blk_idx)
    ld_spec = pl.BlockSpec((TB, 1), blk_idx)

    partials = pl.pallas_call(
        _make_kernel(float(margin), B, D, TB, nt, needs_mask),
        out_shape=jax.ShapeDtypeStruct((num_cores, 1, 1), jnp.float32),
        grid_spec=pltpu.PrefetchScalarGridSpec(
            num_scalar_prefetch=0,
            grid=(num_cores, nt),
            in_specs=[emb_spec, emb_spec, ld_spec],
            out_specs=pl.BlockSpec((1, 1, 1), lambda c, i: (c, 0, 0)),
            scratch_shapes=[pltpu.VMEM((1, 1), jnp.float32)],
        ),
        compiler_params=pltpu.CompilerParams(
            dimension_semantics=("parallel", "arbitrary"),
            vmem_limit_bytes=vmem_limit,
        ),
    )(embed_0, embed_1, label_diff)

    # Single divide by the TRUE batch size, once.
    return jnp.sum(partials) / B


# -------------------------------- reference ---------------------------------

def _reference(embed_0, embed_1, label_0, label_1, margin=1.0):
    e0 = embed_0.astype(jnp.float32)
    e1 = embed_1.astype(jnp.float32)
    dist = jnp.sum((e0 - e1) ** 2, axis=1)
    label_diff = (label_0 != label_1).astype(jnp.float32)
    hinge = jnp.maximum(0.0, margin - jnp.sqrt(dist))
    loss = (1.0 - label_diff) * dist + label_diff * hinge ** 2
    return jnp.mean(loss)


if __name__ == "__main__":
    key = jax.random.PRNGKey(0)
    k0, k1, k2, k3, k4, k5, k6, k7 = jax.random.split(key, 8)

    # --- test 1: small f32 case (matches the original module defaults) -----
    B, D = 8, 32
    embed_0 = jax.random.normal(k0, (B, D), dtype=jnp.float32)
    embed_1 = jax.random.normal(k1, (B, D), dtype=jnp.float32)
    label_0 = jax.random.randint(k2, (B,), 0, 2, dtype=jnp.int32)
    label_1 = jax.random.randint(k3, (B,), 0, 2, dtype=jnp.int32)

    loss = max_margin_contrastive_loss(embed_0, embed_1, label_0, label_1,
                                       margin=1.0)
    jax.block_until_ready(loss)
    ref = _reference(embed_0, embed_1, label_0, label_1, margin=1.0)
    assert jnp.allclose(loss, ref, rtol=1e-4, atol=1e-4), (loss, ref)

    # --- test 2: ragged batch + bf16 embeddings + float labels -------------
    B2, D2 = 300, 96
    e0 = jax.random.normal(k4, (B2, D2), dtype=jnp.bfloat16)
    e1 = jax.random.normal(k5, (B2, D2), dtype=jnp.bfloat16)
    l0 = jax.random.uniform(k6, (B2,), dtype=jnp.float32).round()
    l1 = jax.random.uniform(k7, (B2,), dtype=jnp.float32).round()

    loss2 = max_margin_contrastive_loss(e0, e1, l0, l1, margin=1.0)
    jax.block_until_ready(loss2)
    ref2 = _reference(e0, e1, l0, l1, margin=1.0)
    assert jnp.allclose(loss2, ref2, rtol=1e-3, atol=1e-3), (loss2, ref2)

    # --- test 3: force multi-tile, dual-core grid to exercise the in-kernel
    #     ragged-tail masking and clamped (fully out-of-range) tiles --------
    loss3 = max_margin_contrastive_loss(e0, e1, l0, l1, margin=1.0,
                                        num_cores=2, tile_rows=64)
    jax.block_until_ready(loss3)
    assert jnp.allclose(loss3, ref2, rtol=1e-3, atol=1e-3), (loss3, ref2)

    print("KERNEL_OK")
</pallas_src>

<mosaic_0001>
module attributes {stable_mosaic.version = 11 : i64} {
  func.func @kernel(%arg0: i32, %arg1: i32, %arg2: memref<8x32xf32, #tpu.memory_space<vmem>>, %arg3: memref<8x32xf32, #tpu.memory_space<vmem>>, %arg4: memref<8x1xf32, #tpu.memory_space<vmem>>, %arg5: memref<1x1x1xf32, #tpu.memory_space<vmem>>, %arg6: memref<1x1xf32, #tpu.memory_space<vmem>>) attributes {dimension_semantics = [#tpu.dimension_semantics<parallel>, #tpu.dimension_semantics<arbitrary>], iteration_bounds = array<i64: 1, 1>, scalar_prefetch = 0 : i64, scratch_operands = 1 : i64, tpu.core_type = #tpu.core_type<tc>, window_params = [{transform_indices = @transform_0, window_bounds = array<i64: 8, 32>}, {transform_indices = @transform_1, window_bounds = array<i64: 8, 32>}, {transform_indices = @transform_2, window_bounds = array<i64: 8, 1>}, {transform_indices = @transform_3, window_bounds = array<i64: 1, 1, 1>}]} {
    %c0_i32 = arith.constant 0 : i32
    %0 = arith.cmpi eq, %arg1, %c0_i32 : i32
    %1 = arith.extui %0 : i1 to i32
    %c0_i32_0 = arith.constant 0 : i32
    %2 = arith.cmpi ne, %1, %c0_i32_0 : i32
    scf.if %2 {
      %cst_16 = arith.constant 0.000000e+00 : f32
      %30 = vector.broadcast %cst_16 : f32 to vector<1x1xf32>
      %c0_17 = arith.constant 0 : index
      %c0_18 = arith.constant 0 : index
      %31 = vector.load %arg6[%c0_17, %c0_18] : memref<1x1xf32, #tpu.memory_space<vmem>>, vector<1x1xf32>
      tpu.vector_store %arg6[%c0_17, %c0_18], %30 {strides = array<i32>} : memref<1x1xf32, #tpu.memory_space<vmem>>, vector<1x1xf32>,
    } else {
    }
    %c0 = arith.constant 0 : index
    %c0_1 = arith.constant 0 : index
    %3 = vector.load %arg2[%c0, %c0_1] : memref<8x32xf32, #tpu.memory_space<vmem>>, vector<8x32xf32>
    %c0_2 = arith.constant 0 : index
    %c0_3 = arith.constant 0 : index
    %4 = vector.load %arg3[%c0_2, %c0_3] : memref<8x32xf32, #tpu.memory_space<vmem>>, vector<8x32xf32>
    %5 = arith.subf %3, %4 : vector<8x32xf32>
    %6 = arith.mulf %5, %5 : vector<8x32xf32>
    %cst = arith.constant 1.000000e+00 : f32
    %7 = vector.broadcast %cst : f32 to vector<32x1xf32>
    %cst_4 = arith.constant dense<0.000000e+00> : vector<8x1xf32>
    %8 = tpu.matmul %6, %7, %cst_4 {dimension_numbers = #tpu.dot_dimension_numbers<[1], [0], [0], [1], [0, 0, 1, 1], [], []>, precision = #tpu.contract_precision<fp32>} : vector<8x32xf32>, vector<32x1xf32>, vector<8x1xf32> -> vector<8x1xf32>
    %c0_5 = arith.constant 0 : index
    %c0_6 = arith.constant 0 : index
    %9 = vector.load %arg4[%c0_5, %c0_6] : memref<8x1xf32, #tpu.memory_space<vmem>>, vector<8x1xf32>
    %10 = math.sqrt %8 : vector<8x1xf32>
    %cst_7 = arith.constant 1.000000e+00 : f32
    %11 = vector.broadcast %cst_7 : f32 to vector<8x1xf32>
    %12 = arith.subf %11, %10 : vector<8x1xf32>
    %cst_8 = arith.constant 0.000000e+00 : f32
    %13 = vector.broadcast %cst_8 : f32 to vector<8x1xf32>
    %14 = arith.maximumf %13, %12 : vector<8x1xf32>
    %15 = arith.mulf %14, %14 : vector<8x1xf32>
    %16 = arith.subf %15, %8 : vector<8x1xf32>
    %17 = arith.mulf %9, %16 : vector<8x1xf32>
    %18 = arith.addf %8, %17 : vector<8x1xf32>
    %c0_9 = arith.constant 0 : index
    %c0_10 = arith.constant 0 : index
    %19 = vector.load %arg6[%c0_9, %c0_10] : memref<1x1xf32, #tpu.memory_space<vmem>>, vector<1x1xf32>
    %20 = vector.shape_cast %18 : vector<8x1xf32> to vector<1x8x1xf32>
    %cst_11 = arith.constant dense<0.000000e+00> : vector<1xf32>
    %21 = vector.multi_reduction <add>, %20, %cst_11 [1, 2] : vector<1x8x1xf32> to vector<1xf32>
    %22 = vector.shape_cast %21 : vector<1xf32> to vector<1x1x1xf32>
    %23 = vector.extract %22[0, 0, 0] : f32 from vector<1x1x1xf32>
    %24 = vector.broadcast %23 : f32 to vector<1x1xf32>
    %25 = arith.addf %19, %24 : vector<1x1xf32>
    %c0_12 = arith.constant 0 : index
    %c0_13 = arith.constant 0 : index
    %26 = vector.load %arg6[%c0_12, %c0_13] : memref<1x1xf32, #tpu.memory_space<vmem>>, vector<1x1xf32>
    tpu.vector_store %arg6[%c0_12, %c0_13], %25 {strides = array<i32>} : memref<1x1xf32, #tpu.memory_space<vmem>>, vector<1x1xf32>,
    %c0_i32_14 = arith.constant 0 : i32
    %27 = arith.cmpi eq, %arg1, %c0_i32_14 : i32
    %28 = arith.extui %27 : i1 to i32
    %c0_i32_15 = arith.constant 0 : i32
    %29 = arith.cmpi ne, %28, %c0_i32_15 : i32
    scf.if %29 {
      %c0_16 = arith.constant 0 : index
      %c0_17 = arith.constant 0 : index
      %30 = vector.load %arg6[%c0_16, %c0_17] : memref<1x1xf32, #tpu.memory_space<vmem>>, vector<1x1xf32>
      %31 = vector.shape_cast %30 : vector<1x1xf32> to vector<1x1x1xf32>
      %c0_18 = arith.constant 0 : index
      %c0_19 = arith.constant 0 : index
      %c0_20 = arith.constant 0 : index
      %32 = vector.load %arg5[%c0_18, %c0_19, %c0_20] : memref<1x1x1xf32, #tpu.memory_space<vmem>>, vector<1x1x1xf32>
      tpu.vector_store %arg5[%c0_18, %c0_19, %c0_20], %31 {strides = array<i32>} : memref<1x1x1xf32, #tpu.memory_space<vmem>>, vector<1x1x1xf32>,
    } else {
    }
    return
  }
  func.func @transform_0(%arg0: i32, %arg1: i32) -> (i32, i32) {
    %c1_i32 = arith.constant 1 : i32
    %0 = arith.muli %arg0, %c1_i32 : i32
    %1 = arith.addi %0, %arg1 : i32
    %c0_i32 = arith.constant 0 : i32
    %2 = arith.minsi %1, %c0_i32 : i32
    %c0_i32_0 = arith.constant 0 : i32
    %c0_i32_1 = arith.constant 0 : i32
    return %2, %c0_i32_0 : i32, i32
  }
  func.func @transform_1(%arg0: i32, %arg1: i32) -> (i32, i32) {
    %c1_i32 = arith.constant 1 : i32
    %0 = arith.muli %arg0, %c1_i32 : i32
    %1 = arith.addi %0, %arg1 : i32
    %c0_i32 = arith.constant 0 : i32
    %2 = arith.minsi %1, %c0_i32 : i32
    %c0_i32_0 = arith.constant 0 : i32
    %c0_i32_1 = arith.constant 0 : i32
    return %2, %c0_i32_0 : i32, i32
  }
  func.func @transform_2(%arg0: i32, %arg1: i32) -> (i32, i32) {
    %c1_i32 = arith.constant 1 : i32
    %0 = arith.muli %arg0, %c1_i32 : i32
    %1 = arith.addi %0, %arg1 : i32
    %c0_i32 = arith.constant 0 : i32
    %2 = arith.minsi %1, %c0_i32 : i32
    %c0_i32_0 = arith.constant 0 : i32
    %c0_i32_1 = arith.constant 0 : i32
    return %2, %c0_i32_0 : i32, i32
  }
  func.func @transform_3(%arg0: i32, %arg1: i32) -> (i32, i32, i32) {
    %c0_i32 = arith.constant 0 : i32
    %c0_i32_0 = arith.constant 0 : i32
    %c0_i32_1 = arith.constant 0 : i32
    return %arg0, %c0_i32, %c0_i32_0 : i32, i32, i32
  }
}

</mosaic_0001>

<llo_original>
// kernel: tpu_custom_call.1
$region0: #{tpu_custom_call.1}
  #allocation0 [shape = 'u32[]', space=smem, size = 0x4, offset = 0x4, fixed_abs, tag = 'smem constant byte address 0x4 - core index']
  #allocation1 [shape = 'u32[144,128]{1,0:T(1,128)}', space=vmem, size = 0x12000, scoped, tag = 'internal scratch']
  #allocation2 [shape = 'f32[1,1]{1,0:T(1,128)}', space=vmem, size = 0x200, scoped, tag = 'scratch operand']
  %s0 = inlined_call_operand.vmem [shape: f32[8,32], index: 0, kind: input, shape index: {}]
  %s1 = inlined_call_operand.hbm [shape: f32[8,32], index: 1, kind: input, shape index: {}]
  %s2 = inlined_call_operand.vmem [shape: f32[8,1], index: 2, kind: input, shape index: {}]
  %s3 = inlined_call_operand.hbm [shape: f32[1,1,1], index: 3, kind: output, shape index: {}]
  %s4 = sld [smem:[#allocation0]]
  $region34: #{tpu_custom_call.1} parent=0
    _
  %s6 = ssub.s32 1, %s4
  %s7 = scalar_select 0, %s6, %s4
  $region1: #{tpu_custom_call.1} parent=0
    #allocation3 [shape = 'u8[4096]{0}', space=vmem, size = 0x1000, scoped, tag = 'input window, operand 1, single buffered']
    #allocation4 [shape = 's32[1]{0}', space=sflag, size = 0x4, scoped, tag = 'scoped memory for tpu_custom_call.1']
    #allocation5 [shape = 's32[1]{0}', space=sflag, size = 0x4, scoped, tag = 'scoped memory for tpu_custom_call.1']
    #allocation6 [shape = 'u8[512]{0}', space=vmem, size = 0x400, scoped, tag = 'output window, operand 0, single buffered']
    %8 = vsyncpa [#allocation4], 0
    %9 = vsyncpa [#allocation5], 0
    // Predicated region
    $region2: #{tpu_custom_call.1} parent=1 // pred_check
      _
    $region3: #{tpu_custom_call.1} parent=1 // pred_check_branch
      %11 = sbr.rel (0) target = $region5
    $region4: #{tpu_custom_call.1} parent=1 // pred_region
      %s12 = sadd.s32 0, 0
      %p13 = scmp.lt.s32.totalorder %s12, 0
      %s14 = scalar_select %p13, %s12, 0
      %p15 = scmp.lt.s32.totalorder %s14, 0
      %s16 = scalar_select %p15, %s14, 0
      %s17 = smul.addr %s16, 8
      %s18 = scalar_lea.vmem %s0, %s17
      %s19 = sadd.s32 0, 0
      %p20 = scmp.lt.s32.totalorder %s19, 0
      %s21 = scalar_select %p20, %s19, 0
    $region5: #{tpu_custom_call.1} parent=1 // pred_fallthru
      _
    // Predicated region
    $region6: #{tpu_custom_call.1} parent=1 // pred_check
      _
    $region7: #{tpu_custom_call.1} parent=1 // pred_check_branch
      %23 = sbr.rel (0) target = $region9
    $region8: #{tpu_custom_call.1} parent=1 // pred_region
      %s24 = sadd.s32 0, 0
      %p25 = scmp.lt.s32.totalorder %s24, 0
      %s26 = scalar_select %p25, %s24, 0
      %s28 = ssub.s32 128, 128
      %29 = vsyncadd [#allocation4], %s28
      %s30 = smul.addr %s26, 128
      %s31 = scalar_lea.hbm %s1, %s30
      %s33 = sshll.u32 [#allocation3], 4
      %s34 = int_to_ptr.vmem [resolvable:$true] %s33
      %36 = dma.hbm_to_vmem [thread:$0]  %s31, 128, %s34, [#allocation4]
    $region9: #{tpu_custom_call.1} parent=1 // pred_fallthru
      _
    // Predicated region
    $region10: #{tpu_custom_call.1} parent=1 // pred_check
      _
    $region11: #{tpu_custom_call.1} parent=1 // pred_check_branch
      %38 = sbr.rel (0) target = $region13
    $region12: #{tpu_custom_call.1} parent=1 // pred_region
      %s39 = sadd.s32 0, 0
      %p40 = scmp.lt.s32.totalorder %s39, 0
      %s41 = scalar_select %p40, %s39, 0
      %p42 = scmp.lt.s32.totalorder %s41, 0
      %s43 = scalar_select %p42, %s41, 0
      %s44 = smul.addr %s43, 8
      %s45 = scalar_lea.vmem %s2, %s44
      %s46 = sadd.s32 0, 0
      %p47 = scmp.lt.s32.totalorder %s46, 0
      %s48 = scalar_select %p47, %s46, 0
    $region13: #{tpu_custom_call.1} parent=1 // pred_fallthru
      _
    // Predicated region
    $region14: #{tpu_custom_call.1} parent=1 // pred_check
      _
    $region15: #{tpu_custom_call.1} parent=1 // pred_check_branch
      %50 = sbr.rel (0) target = $region17
    $region16: #{tpu_custom_call.1} parent=1 // pred_region
      %51 = dma.done [#allocation4], 128
    $region17: #{tpu_custom_call.1} parent=1 // pred_fallthru
      _
    %s52 = sadd.s32 0, 0
    %p53 = scmp.lt.s32.totalorder %s52, 0
    %s54 = scalar_select %p53, %s52, 0
    %p55 = scmp.lt.s32.totalorder %s54, 0
    %s56 = scalar_select %p55, %s54, 0
    %s57 = smul.addr %s56, 8
    %s58 = scalar_lea.vmem %s0, %s57
    %s59 = sadd.s32 0, 0
    %p60 = scmp.lt.s32.totalorder %s59, 0
    %s61 = scalar_select %p60, %s59, 0
    %p62 = scmp.lt.s32.totalorder %s61, 0
    %s63 = scalar_select %p62, %s61, 0
    %s64 = smul.addr %s63, 8
    %s65 = scalar_lea.vmem %s2, %s64
    %s66 = sadd.s32 0, 0
    %p67 = scmp.lt.s32.totalorder %s66, 0
    %s68 = scalar_select %p67, %s66, 0
    %p69 = scmp.lt.s32.totalorder %s68, 0
    %s70 = scalar_select %p69, %s68, 0
    %s71 = smul.addr %s70, 8
    %s72 = scalar_lea.vmem %s0, %s71
    %s73 = sadd.s32 0, 0
    %p74 = scmp.lt.s32.totalorder %s73, 0
    %s75 = scalar_select %p74, %s73, 0
    %s76 = sadd.s32 0, 0
    %p77 = scmp.lt.s32.totalorder %s76, 0
    %s78 = scalar_select %p77, %s76, 0
    %s79 = sadd.s32 0, 0
    %p80 = scmp.lt.s32.totalorder %s79, 0
    %s81 = scalar_select %p80, %s79, 0
    %p82 = scmp.lt.s32.totalorder %s81, 0
    %s83 = scalar_select %p82, %s81, 0
    %s84 = smul.addr %s83, 8
    %s85 = scalar_lea.vmem %s2, %s84
    %s86 = sadd.s32 0, 0
    %p87 = scmp.lt.s32.totalorder %s86, 0
    %s88 = scalar_select %p87, %s86, 0
    %p89 = scmp.eq.s32.totalorder 0, 0
    // Predicated region
    $region18: #{tpu_custom_call.1} parent=1 // pred_check
      %p90 = pneg %p89
    $region19: #{tpu_custom_call.1} parent=1 // pred_check_branch
      %92 = sbr.rel (%p90) target = $region21
    $region20: #{tpu_custom_call.1} parent=1 // pred_region
      %vm93 = vcmask 0
      %94 = vst.msk [vmem:[#allocation2] sm:$0x1] %vm93, 0.0
    $region21: #{tpu_custom_call.1} parent=1 // pred_fallthru
      _
    %v95 = vld [vmem:[%s72] sm:$0xff]
    %v96 = vld [vmem:[#allocation3] sm:$0xff]
    %v97 = vsub.f32 %v95, %v96
    %v98 = vmul.f32 %v97, %v97
    %vm99 = vcmask 261120
    %v101 = vsel %vm99, %v98, 0
    %103 = vmatprep.subr.mxu0 0.0
    %104 = vmatpush1.msra.mxu0 1.0
    %105 = vmatprep.subr.mxu0 0.0
    %106 = vmatpush1.msra.mxu0 1.0
    %107 = vmatprep.subr.mxu0 0.0
    %108 = vmatpush1.msra.mxu0 1.0
    %109 = vmatprep.subr.mxu0 0.0
    %110 = vmatpush1.msra.mxu0 1.0
    %111 = vmatprep.subr.mxu0 0.0
    %112 = vmatpush1.msra.mxu0 0.0
    %113 = vmatprep.subr.mxu0 0.0
    %114 = vmatpush1.msra.mxu0 0.0
    %115 = vmatprep.subr.mxu0 0.0
    %116 = vmatpush1.msra.mxu0 0.0
    %117 = vmatprep.subr.mxu0 0.0
    %118 = vmatpush1.msra.mxu0 0.0
    %119 = vmatprep.subr.mxu0 0.0
    %120 = vmatpush1.msra.mxu0 0.0
    %121 = vmatprep.subr.mxu0 0.0
    %122 = vmatpush1.msra.mxu0 0.0
    %123 = vmatprep.subr.mxu0 0.0
    %124 = vmatpush1.msra.mxu0 0.0
    %125 = vmatprep.subr.mxu0 0.0
    %126 = vmatpush1.msra.mxu0 0.0
    %127 = vmatprep.subr.mxu0 0.0
    %128 = vmatpush1.msra.mxu0 0.0
    %129 = vmatprep.subr.mxu0 0.0
    %130 = vmatpush1.msra.mxu0 0.0
    %131 = vmatprep.subr.mxu0 0.0
    %132 = vmatpush1.msra.mxu0 0.0
    %133 = vmatprep.subr.mxu0 0.0
    %134 = vmatpush1.msra.mxu0 0.0
    %135 = vmatprep.subr.mxu0 0.0
    %136 = vmatpush1.msra.mxu0 0.0
    %137 = vmatprep.subr.mxu0 0.0
    %138 = vmatpush1.msra.mxu0 0.0
    %139 = vmatprep.subr.mxu0 0.0
    %140 = vmatpush1.msra.mxu0 0.0
    %141 = vmatprep.subr.mxu0 0.0
    %142 = vmatpush1.msra.mxu0 0.0
    %143 = vmatprep.subr.mxu0 0.0
    %144 = vmatpush1.msra.mxu0 0.0
    %145 = vmatprep.subr.mxu0 0.0
    %146 = vmatpush1.msra.mxu0 0.0
    %147 = vmatprep.subr.mxu0 0.0
    %148 = vmatpush1.msra.mxu0 0.0
    %149 = vmatprep.subr.mxu0 0.0
    %150 = vmatpush1.msra.mxu0 0.0
    %151 = vmatprep.subr.mxu0 0.0
    %152 = vmatpush1.msra.mxu0 0.0
    %153 = vmatprep.subr.mxu0 0.0
    %154 = vmatpush1.msra.mxu0 0.0
    %155 = vmatprep.subr.mxu0 0.0
    %156 = vmatpush1.msra.mxu0 0.0
    %157 = vmatprep.subr.mxu0 0.0
    %158 = vmatpush1.msra.mxu0 0.0
    %159 = vmatprep.subr.mxu0 0.0
    %160 = vmatpush1.msra.mxu0 0.0
    %161 = vmatprep.subr.mxu0 0.0
    %162 = vmatpush1.msra.mxu0 0.0
    %163 = vmatprep.subr.mxu0 0.0
    %164 = vmatpush1.msra.mxu0 0.0
    %165 = vmatprep.subr.mxu0 0.0
    %166 = vmatpush1.msra.mxu0 0.0
    %167 = vmatprep.mubr.f32.mxu0 0.0
    %v168 = vand.u32 %v101, 4294901760
    %v169 = vsub.f32 %v101, %v168
    %v170 = vand.u32 %v169, 4294901760
    %v171 = vsub.f32 %v169, %v170
    %v172 = vand.u32 %v171, 4294901760
    %173 = vmatmul.mubr.f32.gmra.mrb[0].mxu0 %v172
    %v174 = vpop.f32.mrb[0].mxu0
    %v175 = vadd.f32 0.0, %v174
    %v176 = vpop.f32.mrb[0].mxu0
    %177 = vdwg.mxu0
    %178 = vmatprep.subr.mxu0 0.0
    %179 = vmatpush1.msra.mxu0 0.0
    %180 = vmatprep.subr.mxu0 0.0
    %181 = vmatpush1.msra.mxu0 0.0
    %182 = vmatprep.subr.mxu0 0.0
    %183 = vmatpush1.msra.mxu0 0.0
    %184 = vmatprep.subr.mxu0 0.0
    %185 = vmatpush1.msra.mxu0 0.0
    %186 = vmatprep.subr.mxu0 0.0
    %187 = vmatpush1.msra.mxu0 0.0
    %188 = vmatprep.subr.mxu0 0.0
    %189 = vmatpush1.msra.mxu0 0.0
    %190 = vmatprep.subr.mxu0 0.0
    %191 = vmatpush1.msra.mxu0 0.0
    %192 = vmatprep.subr.mxu0 0.0
    %193 = vmatpush1.msra.mxu0 0.0
    %194 = vmatprep.subr.mxu0 0.0
    %195 = vmatpush1.msra.mxu0 0.0
    %196 = vmatprep.subr.mxu0 0.0
    %197 = vmatpush1.msra.mxu0 0.0
    %198 = vmatprep.subr.mxu0 0.0
    %199 = vmatpush1.msra.mxu0 0.0
    %200 = vmatprep.subr.mxu0 0.0
    %201 = vmatpush1.msra.mxu0 0.0
    %202 = vmatprep.subr.mxu0 0.0
    %203 = vmatpush1.msra.mxu0 0.0
    %204 = vmatprep.subr.mxu0 0.0
    %205 = vmatpush1.msra.mxu0 0.0
    %206 = vmatprep.subr.mxu0 0.0
    %207 = vmatpush1.msra.mxu0 0.0
    %208 = vmatprep.subr.mxu0 0.0
    %209 = vmatpush1.msra.mxu0 0.0
    %210 = vmatprep.subr.mxu0 0.0
    %211 = vmatpush1.msra.mxu0 0.0
    %212 = vmatprep.subr.mxu0 0.0
    %213 = vmatpush1.msra.mxu0 0.0
    %214 = vmatprep.subr.mxu0 0.0
    %215 = vmatpush1.msra.mxu0 0.0
    %216 = vmatprep.subr.mxu0 0.0
    %217 = vmatpush1.msra.mxu0 0.0
    %218 = vmatprep.subr.mxu0 0.0
    %219 = vmatpush1.msra.mxu0 0.0
    %220 = vmatprep.subr.mxu0 0.0
    %221 = vmatpush1.msra.mxu0 0.0
    %222 = vmatprep.subr.mxu0 0.0
    %223 = vmatpush1.msra.mxu0 0.0
    %224 = vmatprep.subr.mxu0 0.0
    %225 = vmatpush1.msra.mxu0 0.0
    %226 = vmatprep.subr.mxu0 0.0
    %227 = vmatpush1.msra.mxu0 0.0
    %228 = vmatprep.subr.mxu0 0.0
    %229 = vmatpush1.msra.mxu0 0.0
    %230 = vmatprep.subr.mxu0 0.0
    %231 = vmatpush1.msra.mxu0 0.0
    %232 = vmatprep.subr.mxu0 0.0
    %233 = vmatpush1.msra.mxu0 0.0
    %234 = vmatprep.subr.mxu0 0.0
    %235 = vmatpush1.msra.mxu0 0.0
    %236 = vmatprep.subr.mxu0 0.0
    %237 = vmatpush1.msra.mxu0 0.0
    %238 = vmatprep.subr.mxu0 0.0
    %239 = vmatpush1.msra.mxu0 0.0
    %240 = vmatprep.subr.mxu0 0.0
    %241 = vmatpush1.msra.mxu0 0.0
    %242 = vmatprep.mubr.f32.mxu0 0.0
    %v243 = vand.u32 %v101, 4294901760
    %244 = vmatmul.mubr.f32.gmra.mrb[0].mxu0 %v243
    %v245 = vpop.f32.mrb[0].mxu0
    %v246 = vadd.f32 %v175, %v245
    %v247 = vpop.f32.mrb[0].mxu0
    %248 = vdwg.mxu0
    %249 = vmatprep.subr.mxu0 0.0
    %250 = vmatpush1.msra.mxu0 0.0
    %251 = vmatprep.subr.mxu0 0.0
    %252 = vmatpush1.msra.mxu0 0.0
    %253 = vmatprep.subr.mxu0 0.0
    %254 = vmatpush1.msra.mxu0 0.0
    %255 = vmatprep.subr.mxu0 0.0
    %256 = vmatpush1.msra.mxu0 0.0
    %257 = vmatprep.subr.mxu0 0.0
    %258 = vmatpush1.msra.mxu0 0.0
    %259 = vmatprep.subr.mxu0 0.0
    %260 = vmatpush1.msra.mxu0 0.0
    %261 = vmatprep.subr.mxu0 0.0
    %262 = vmatpush1.msra.mxu0 0.0
    %263 = vmatprep.subr.mxu0 0.0
    %264 = vmatpush1.msra.mxu0 0.0
    %265 = vmatprep.subr.mxu0 0.0
    %266 = vmatpush1.msra.mxu0 0.0
    %267 = vmatprep.subr.mxu0 0.0
    %268 = vmatpush1.msra.mxu0 0.0
    %269 = vmatprep.subr.mxu0 0.0
    %270 = vmatpush1.msra.mxu0 0.0
    %271 = vmatprep.subr.mxu0 0.0
    %272 = vmatpush1.msra.mxu0 0.0
    %273 = vmatprep.subr.mxu0 0.0
    %274 = vmatpush1.msra.mxu0 0.0
    %275 = vmatprep.subr.mxu0 0.0
    %276 = vmatpush1.msra.mxu0 0.0
    %277 = vmatprep.subr.mxu0 0.0
    %278 = vmatpush1.msra.mxu0 0.0
    %279 = vmatprep.subr.mxu0 0.0
    %280 = vmatpush1.msra.mxu0 0.0
    %281 = vmatprep.subr.mxu0 0.0
    %282 = vmatpush1.msra.mxu0 0.0
    %283 = vmatprep.subr.mxu0 0.0
    %284 = vmatpush1.msra.mxu0 0.0
    %285 = vmatprep.subr.mxu0 0.0
    %286 = vmatpush1.msra.mxu0 0.0
    %287 = vmatprep.subr.mxu0 0.0
    %288 = vmatpush1.msra.mxu0 0.0
    %289 = vmatprep.subr.mxu0 0.0
    %290 = vmatpush1.msra.mxu0 0.0
    %291 = vmatprep.subr.mxu0 0.0
    %292 = vmatpush1.msra.mxu0 0.0
    %293 = vmatprep.subr.mxu0 0.0
    %294 = vmatpush1.msra.mxu0 0.0
    %295 = vmatprep.subr.mxu0 0.0
    %296 = vmatpush1.msra.mxu0 0.0
    %297 = vmatprep.subr.mxu0 0.0
    %298 = vmatpush1.msra.mxu0 0.0
    %299 = vmatprep.subr.mxu0 0.0
    %300 = vmatpush1.msra.mxu0 0.0
    %301 = vmatprep.subr.mxu0 0.0
    %302 = vmatpush1.msra.mxu0 0.0
    %303 = vmatprep.subr.mxu0 0.0
    %304 = vmatpush1.msra.mxu0 0.0
    %305 = vmatprep.subr.mxu0 0.0
    %306 = vmatpush1.msra.mxu0 0.0
    %307 = vmatprep.subr.mxu0 0.0
    %308 = vmatpush1.msra.mxu0 0.0
    %309 = vmatprep.subr.mxu0 0.0
    %310 = vmatpush1.msra.mxu0 0.0
    %311 = vmatprep.subr.mxu0 0.0
    %312 = vmatpush1.msra.mxu0 0.0
    %313 = vmatprep.mubr.f32.mxu0 0.0
    %v314 = vand.u32 %v101, 4294901760
    %v315 = vsub.f32 %v101, %v314
    %316 = vmatmul.mubr.f32.gmra.mrb[0].mxu0 %v315
    %v317 = vpop.f32.mrb[0].mxu0
    %v318 = vadd.f32 %v246, %v317
    %v319 = vpop.f32.mrb[0].mxu0
    %320 = vdwg.mxu0
    %321 = vmatprep.subr.mxu0 0.0
    %322 = vmatpush1.msra.mxu0 1.0
    %323 = vmatprep.subr.mxu0 0.0
    %324 = vmatpush1.msra.mxu0 1.0
    %325 = vmatprep.subr.mxu0 0.0
    %326 = vmatpush1.msra.mxu0 1.0
    %327 = vmatprep.subr.mxu0 0.0
    %328 = vmatpush1.msra.mxu0 1.0
    %329 = vmatprep.subr.mxu0 0.0
    %330 = vmatpush1.msra.mxu0 0.0
    %331 = vmatprep.subr.mxu0 0.0
    %332 = vmatpush1.msra.mxu0 0.0
    %333 = vmatprep.subr.mxu0 0.0
    %334 = vmatpush1.msra.mxu0 0.0
    %335 = vmatprep.subr.mxu0 0.0
    %336 = vmatpush1.msra.mxu0 0.0
    %337 = vmatprep.subr.mxu0 0.0
    %338 = vmatpush1.msra.mxu0 0.0
    %339 = vmatprep.subr.mxu0 0.0
    %340 = vmatpush1.msra.mxu0 0.0
    %341 = vmatprep.subr.mxu0 0.0
    %342 = vmatpush1.msra.mxu0 0.0
    %343 = vmatprep.subr.mxu0 0.0
    %344 = vmatpush1.msra.mxu0 0.0
    %345 = vmatprep.subr.mxu0 0.0
    %346 = vmatpush1.msra.mxu0 0.0
    %347 = vmatprep.subr.mxu0 0.0
    %348 = vmatpush1.msra.mxu0 0.0
    %349 = vmatprep.subr.mxu0 0.0
    %350 = vmatpush1.msra.mxu0 0.0
    %351 = vmatprep.subr.mxu0 0.0
    %352 = vmatpush1.msra.mxu0 0.0
    %353 = vmatprep.subr.mxu0 0.0
    %354 = vmatpush1.msra.mxu0 0.0
    %355 = vmatprep.subr.mxu0 0.0
    %356 = vmatpush1.msra.mxu0 0.0
    %357 = vmatprep.subr.mxu0 0.0
    %358 = vmatpush1.msra.mxu0 0.0
    %359 = vmatprep.subr.mxu0 0.0
    %360 = vmatpush1.msra.mxu0 0.0
    %361 = vmatprep.subr.mxu0 0.0
    %362 = vmatpush1.msra.mxu0 0.0
    %363 = vmatprep.subr.mxu0 0.0
    %364 = vmatpush1.msra.mxu0 0.0
    %365 = vmatprep.subr.mxu0 0.0
    %366 = vmatpush1.msra.mxu0 0.0
    %367 = vmatprep.subr.mxu0 0.0
    %368 = vmatpush1.msra.mxu0 0.0
    %369 = vmatprep.subr.mxu0 0.0
    %370 = vmatpush1.msra.mxu0 0.0
    %371 = vmatprep.subr.mxu0 0.0
    %372 = vmatpush1.msra.mxu0 0.0
    %373 = vmatprep.subr.mxu0 0.0
    %374 = vmatpush1.msra.mxu0 0.0
    %375 = vmatprep.subr.mxu0 0.0
    %376 = vmatpush1.msra.mxu0 0.0
    %377 = vmatprep.subr.mxu0 0.0
    %378 = vmatpush1.msra.mxu0 0.0
    %379 = vmatprep.subr.mxu0 0.0
    %380 = vmatpush1.msra.mxu0 0.0
    %381 = vmatprep.subr.mxu0 0.0
    %382 = vmatpush1.msra.mxu0 0.0
    %383 = vmatprep.subr.mxu0 0.0
    %384 = vmatpush1.msra.mxu0 0.0
    %385 = vmatprep.mubr.f32.mxu0 0.0
    %v386 = vand.u32 %v101, 4294901760
    %v387 = vsub.f32 %v101, %v386
    %v388 = vand.u32 %v387, 4294901760
    %389 = vmatmul.mubr.f32.gmra.mrb[0].mxu0 %v388
    %v390 = vpop.f32.mrb[0].mxu0
    %v391 = vadd.f32 %v318, %v390
    %v392 = vpop.f32.mrb[0].mxu0
    %393 = vdwg.mxu0
    %394 = vmatprep.subr.mxu0 0.0
    %395 = vmatpush1.msra.mxu0 0.0
    %396 = vmatprep.subr.mxu0 0.0
    %397 = vmatpush1.msra.mxu0 0.0
    %398 = vmatprep.subr.mxu0 0.0
    %399 = vmatpush1.msra.mxu0 0.0
    %400 = vmatprep.subr.mxu0 0.0
    %401 = vmatpush1.msra.mxu0 0.0
    %402 = vmatprep.subr.mxu0 0.0
    %403 = vmatpush1.msra.mxu0 0.0
    %404 = vmatprep.subr.mxu0 0.0
    %405 = vmatpush1.msra.mxu0 0.0
    %406 = vmatprep.subr.mxu0 0.0
    %407 = vmatpush1.msra.mxu0 0.0
    %408 = vmatprep.subr.mxu0 0.0
    %409 = vmatpush1.msra.mxu0 0.0
    %410 = vmatprep.subr.mxu0 0.0
    %411 = vmatpush1.msra.mxu0 0.0
    %412 = vmatprep.subr.mxu0 0.0
    %413 = vmatpush1.msra.mxu0 0.0
    %414 = vmatprep.subr.mxu0 0.0
    %415 = vmatpush1.msra.mxu0 0.0
    %416 = vmatprep.subr.mxu0 0.0
    %417 = vmatpush1.msra.mxu0 0.0
    %418 = vmatprep.subr.mxu0 0.0
    %419 = vmatpush1.msra.mxu0 0.0
    %420 = vmatprep.subr.mxu0 0.0
    %421 = vmatpush1.msra.mxu0 0.0
    %422 = vmatprep.subr.mxu0 0.0
    %423 = vmatpush1.msra.mxu0 0.0
    %424 = vmatprep.subr.mxu0 0.0
    %425 = vmatpush1.msra.mxu0 0.0
    %426 = vmatprep.subr.mxu0 0.0
    %427 = vmatpush1.msra.mxu0 0.0
    %428 = vmatprep.subr.mxu0 0.0
    %429 = vmatpush1.msra.mxu0 0.0
    %430 = vmatprep.subr.mxu0 0.0
    %431 = vmatpush1.msra.mxu0 0.0
    %432 = vmatprep.subr.mxu0 0.0
    %433 = vmatpush1.msra.mxu0 0.0
    %434 = vmatprep.subr.mxu0 0.0
    %435 = vmatpush1.msra.mxu0 0.0
    %436 = vmatprep.subr.mxu0 0.0
    %437 = vmatpush1.msra.mxu0 0.0
    %438 = vmatprep.subr.mxu0 0.0
    %439 = vmatpush1.msra.mxu0 0.0
    %440 = vmatprep.subr.mxu0 0.0
    %441 = vmatpush1.msra.mxu0 0.0
    %442 = vmatprep.subr.mxu0 0.0
    %443 = vmatpush1.msra.mxu0 0.0
    %444 = vmatprep.subr.mxu0 0.0
    %445 = vmatpush1.msra.mxu0 0.0
    %446 = vmatprep.subr.mxu0 0.0
    %447 = vmatpush1.msra.mxu0 0.0
    %448 = vmatprep.subr.mxu0 0.0
    %449 = vmatpush1.msra.mxu0 0.0
    %450 = vmatprep.subr.mxu0 0.0
    %451 = vmatpush1.msra.mxu0 0.0
    %452 = vmatprep.subr.mxu0 0.0
    %453 = vmatpush1.msra.mxu0 0.0
    %454 = vmatprep.subr.mxu0 0.0
    %455 = vmatpush1.msra.mxu0 0.0
    %456 = vmatprep.subr.mxu0 0.0
    %457 = vmatpush1.msra.mxu0 0.0
    %458 = vmatprep.mubr.f32.mxu0 0.0
    %v459 = vand.u32 %v101, 4294901760
    %460 = vmatmul.mubr.f32.gmra.mrb[0].mxu0 %v459
    %v461 = vpop.f32.mrb[0].mxu0
    %v462 = vadd.f32 %v391, %v461
    %v463 = vpop.f32.mrb[0].mxu0
    %464 = vdwg.mxu0
    %465 = vmatprep.subr.mxu0 0.0
    %466 = vmatpush1.msra.mxu0 1.0
    %467 = vmatprep.subr.mxu0 0.0
    %468 = vmatpush1.msra.mxu0 1.0
    %469 = vmatprep.subr.mxu0 0.0
    %470 = vmatpush1.msra.mxu0 1.0
    %471 = vmatprep.subr.mxu0 0.0
    %472 = vmatpush1.msra.mxu0 1.0
    %473 = vmatprep.subr.mxu0 0.0
    %474 = vmatpush1.msra.mxu0 0.0
    %475 = vmatprep.subr.mxu0 0.0
    %476 = vmatpush1.msra.mxu0 0.0
    %477 = vmatprep.subr.mxu0 0.0
    %478 = vmatpush1.msra.mxu0 0.0
    %479 = vmatprep.subr.mxu0 0.0
    %480 = vmatpush1.msra.mxu0 0.0
    %481 = vmatprep.subr.mxu0 0.0
    %482 = vmatpush1.msra.mxu0 0.0
    %483 = vmatprep.subr.mxu0 0.0
    %484 = vmatpush1.msra.mxu0 0.0
    %485 = vmatprep.subr.mxu0 0.0
    %486 = vmatpush1.msra.mxu0 0.0
    %487 = vmatprep.subr.mxu0 0.0
    %488 = vmatpush1.msra.mxu0 0.0
    %489 = vmatprep.subr.mxu0 0.0
    %490 = vmatpush1.msra.mxu0 0.0
    %491 = vmatprep.subr.mxu0 0.0
    %492 = vmatpush1.msra.mxu0 0.0
    %493 = vmatprep.subr.mxu0 0.0
    %494 = vmatpush1.msra.mxu0 0.0
    %495 = vmatprep.subr.mxu0 0.0
    %496 = vmatpush1.msra.mxu0 0.0
    %497 = vmatprep.subr.mxu0 0.0
    %498 = vmatpush1.msra.mxu0 0.0
    %499 = vmatprep.subr.mxu0 0.0
    %500 = vmatpush1.msra.mxu0 0.0
    %501 = vmatprep.subr.mxu0 0.0
    %502 = vmatpush1.msra.mxu0 0.0
    %503 = vmatprep.subr.mxu0 0.0
    %504 = vmatpush1.msra.mxu0 0.0
    %505 = vmatprep.subr.mxu0 0.0
    %506 = vmatpush1.msra.mxu0 0.0
    %507 = vmatprep.subr.mxu0 0.0
    %508 = vmatpush1.msra.mxu0 0.0
    %509 = vmatprep.subr.mxu0 0.0
    %510 = vmatpush1.msra.mxu0 0.0
    %511 = vmatprep.subr.mxu0 0.0
    %512 = vmatpush1.msra.mxu0 0.0
    %513 = vmatprep.subr.mxu0 0.0
    %514 = vmatpush1.msra.mxu0 0.0
    %515 = vmatprep.subr.mxu0 0.0
    %516 = vmatpush1.msra.mxu0 0.0
    %517 = vmatprep.subr.mxu0 0.0
    %518 = vmatpush1.msra.mxu0 0.0
    %519 = vmatprep.subr.mxu0 0.0
    %520 = vmatpush1.msra.mxu0 0.0
    %521 = vmatprep.subr.mxu0 0.0
    %522 = vmatpush1.msra.mxu0 0.0
    %523 = vmatprep.subr.mxu0 0.0
    %524 = vmatpush1.msra.mxu0 0.0
    %525 = vmatprep.subr.mxu0 0.0
    %526 = vmatpush1.msra.mxu0 0.0
    %527 = vmatprep.subr.mxu0 0.0
    %528 = vmatpush1.msra.mxu0 0.0
    %529 = vmatprep.mubr.f32.mxu0 0.0
    %v530 = vand.u32 %v101, 4294901760
    %531 = vmatmul.mubr.f32.gmra.mrb[0].mxu0 %v530
    %v532 = vpop.f32.mrb[0].mxu0
    %v533 = vadd.f32 %v462, %v532
    %v534 = vpop.f32.mrb[0].mxu0
    %535 = vdwg.mxu0
    %v536 = vld [vmem:[%s85] sm:$0xff]
    %v537 = vrsqrt.pop %v533
    %v538 = vmul.f32 %v533, %v537
    %vm539 = vcmp.eq.f32.partialorder %v533, inf
    %v540 = vsel %vm539, %v533, %v538
    %vm541 = vcmp.eq.f32.partialorder %v533, 0.0
    %v542 = vand.u32 %v533, 2147483648
    %v543 = vsel %vm541, %v542, %v540
    %v544 = vsub.f32 1.0, %v543
    %v545 = vmax.f32 %v544, 0.0
    %v546 = vmul.f32 %v545, %v545
    %v547 = vsub.f32 %v546, %v533
    %v548 = vmul.f32 %v536, %v547
    %v549 = vadd.f32 %v533, %v548
    %v550 = vld [vmem:[#allocation2] sm:$0x1]
    %vm551 = vcmask 7168
    %v552 = vsel %vm551, %v549, 0.0
    %553 = vadd.xlane.f32.xlu0 %v552
    %v554 = vpop.xlane.xlu0 %553
    %v555 = vrot.slane %v554, 4
    %v556 = vadd.f32 %v554, %v555
    %v557 = vrot.slane %v556, 2
    %v558 = vadd.f32 %v556, %v557
    %v559 = vrot.slane %v558, 1
    %v560 = vadd.f32 %v558, %v559
    %s561 = vtos %v560
    %v562 = vstv %s561
    %v563 = vadd.f32 %v550, %v562
    %vm564 = vcmask 0
    %565 = vst.msk [vmem:[#allocation2] sm:$0x1] %vm564, %v563
    // Predicated region
    $region22: #{tpu_custom_call.1} parent=1 // pred_check
      %p566 = pneg %p89
    $region23: #{tpu_custom_call.1} parent=1 // pred_check_branch
      %568 = sbr.rel (%p566) target = $region25
    $region24: #{tpu_custom_call.1} parent=1 // pred_region
      %v569 = vld [vmem:[#allocation2] sm:$0x1]
      %570 = vst.msk [vmem:[#allocation6] sm:$0x1] %vm564, %v569
    $region25: #{tpu_custom_call.1} parent=1 // pred_fallthru
      _
    // Predicated region
    $region26: #{tpu_custom_call.1} parent=1 // pred_check
      _
    $region27: #{tpu_custom_call.1} parent=1 // pred_check_branch
      %572 = sbr.rel (0) target = $region29
    $region28: #{tpu_custom_call.1} parent=1 // pred_region
      %s574 = ssub.s32 16, 16
      %575 = vsyncadd [#allocation5], %s574
      %s577 = sshll.u32 [#allocation6], 4
      %s578 = int_to_ptr.vmem [resolvable:$true] %s577
      %580 = dma.vmem_to_hbm [thread:$0]  %s578, 16, %s3, [#allocation5]
    $region29: #{tpu_custom_call.1} parent=1 // pred_fallthru
      _
    // Predicated region
    $region30: #{tpu_custom_call.1} parent=1 // pred_check
      _
    $region31: #{tpu_custom_call.1} parent=1 // pred_check_branch
      %582 = sbr.rel (0) target = $region33
    $region32: #{tpu_custom_call.1} parent=1 // pred_region
      %583 = dma.done [#allocation5], 16
    $region33: #{tpu_custom_call.1} parent=1 // pred_fallthru
      _
    %584 = vsyncpa [#allocation4], 1
    %585 = vsyncpa [#allocation5], 1

</llo_original>
